<compile_context>
chip_gen: v7x
topology: tpu7x:2x2x1
jax: 0.10.0
libtpu: 0.0.40
codegen_flags: <defaults>
</compile_context>

<pallas_src>
import functools

import jax
import jax.numpy as jnp
from jax.experimental import pallas as pl
from jax.experimental.pallas import tpu as pltpu


def _attention_kernel(x_ref, wT_ref, b_ref, v_ref, out_ref, attw_ref,
                      *, tanh_dtype):
    # x_ref:   (TB, S, D)  batch tile of LSTM outputs (bf16 or f32)
    # wT_ref:  (D, D)      attention.weight, pre-transposed (y = x @ wT + b)
    # b_ref:   (1, D)      attention.bias                     (f32)
    # v_ref:   (1, D)      context_vector.weight as a row     (f32)
    # out_ref: (TB, D)     weighted output                    (f32)
    # attw_ref:(TB, S)     attention weights (post-softmax)   (f32)
    TB, S, D = x_ref.shape

    x = x_ref[...]                                   # (TB, S, D), native dtype

    # ---- h = tanh(x @ W^T + b): one MXU matmul with M = TB*S rows. ----
    # Collapsing (TB, S) keeps D on the lane axis; S is a multiple of 8 so the
    # sublane tiling stays aligned (no relayout copy).
    x2 = x.reshape(TB * S, D)
    acc = jnp.dot(x2, wT_ref[...], preferred_element_type=jnp.float32)
    acc = acc + b_ref[...]                           # (TB*S, D) f32
    h = jnp.tanh(acc.astype(tanh_dtype))             # bf16 EUP on v6e/v7x

    # ---- scores = h @ v (N=1): VPU multiply + XLU lane reduce, not MXU. ----
    h3 = h.reshape(TB, S, D)
    # bf16 * f32 promotes to f32, so the cross-lane reduction accumulates f32.
    scores = jnp.sum(h3 * v_ref[...], axis=-1)       # (TB, S), S on lanes

    # ---- softmax over the sequence axis (lane reductions, exact divide). ----
    m = jnp.max(scores, axis=-1, keepdims=True)
    e = jnp.exp(scores - m)
    attw = e / jnp.sum(e, axis=-1, keepdims=True)    # rows sum to 1 (f32)

    # ---- weighted_output = sum_s x[:, s, :] * attw[:, s] (sublane reduce). ----
    # No eager f32 copy of the tile: bf16 x promotes against f32 attw.
    out_ref[...] = jnp.sum(x * attw[:, :, None], axis=1).astype(out_ref.dtype)
    attw_ref[...] = attw.astype(attw_ref.dtype)


def _tpu_flags():
    """Best-effort generation detection; conservative defaults if unknown."""
    try:
        kind = jax.devices()[0].device_kind.lower()
    except Exception:
        kind = ""
    is_v5 = "v5" in kind
    is_v6 = "v6" in kind
    is_v7 = ("7" in kind) and not (is_v5 or is_v6)
    single_core = is_v5 or is_v6
    return is_v5, is_v6, is_v7, single_core


def _pick_batch_tile(B, S, target_rows, min_steps=1):
    """Return (TB, B_pad).

    TB is always a multiple of 8 (sublane-aligned for the (TB, D)/(TB, S)
    output blocks), TB*S <= target_rows, and when min_steps > 1 (multi-TC
    chips) the grid gets at least ~min_steps steps if B allows it.  B is
    padded up to a multiple of TB; padded rows are computed and discarded.
    """
    cap = max(target_rows // max(S, 1), 8)
    cap = max((cap // 8) * 8, 8)
    if min_steps > 1:
        per_step = -(-B // min_steps)                 # ceil(B / min_steps)
        per_step = max(((per_step + 7) // 8) * 8, 8)  # round up to mult of 8
        cap = min(cap, per_step)
    tb = min(cap, max(((B + 7) // 8) * 8, 8))         # never bigger than padded B
    b_pad = ((B + tb - 1) // tb) * tb
    return tb, b_pad


def attention_forward(lstm_outputs, attn_weight, attn_bias, ctx_weight,
                      *, cast_inputs_to_bf16=True, target_rows=None):
    """Pallas equivalent of Attention.forward.

    lstm_outputs: (B, S, D)      D = hidden_dim * 2
    attn_weight:  (D, D)  PyTorch nn.Linear weight (out_features x in_features)
    attn_bias:    (D,)
    ctx_weight:   (1, D)  context_vector weight (no bias)

    Returns (weighted_output (B, D) f32, attention_weights (B, S) f32).
    """
    B, S, D = lstm_outputs.shape
    is_v5, is_v6, is_v7, single_core = _tpu_flags()
    known_big_vmem = is_v5 or is_v6                   # 128 MiB physical VMEM

    if target_rows is None:
        # v5e/v6e: 128 MiB VMEM -> big tiles; v7x / unknown: 64 MiB -> smaller.
        target_rows = 8192 if known_big_vmem else 4096
    vmem_limit = (96 if known_big_vmem else 40) * 1024 * 1024
    min_steps = 1 if single_core else 4               # shard across v7x's 2 TCs

    TB, B_pad = _pick_batch_tile(B, S, target_rows, min_steps)
    grid = (B_pad // TB,)

    wT = attn_weight.T                                # so that y = x @ wT + b
    b2d = attn_bias.reshape(1, D).astype(jnp.float32)
    v2d = ctx_weight.reshape(1, D).astype(jnp.float32)

    x = lstm_outputs
    if cast_inputs_to_bf16:
        # Halves the dominant HBM stream; MXU takes bf16 natively on all gens.
        x = x.astype(jnp.bfloat16)
        wT = wT.astype(jnp.bfloat16)

    if B_pad != B:
        x = jnp.pad(x, ((0, B_pad - B), (0, 0), (0, 0)))

    # bf16 tanh only where the EUP supports it (v6e / v7x); f32 elsewhere.
    tanh_dtype = (jnp.bfloat16
                  if (cast_inputs_to_bf16 and (is_v6 or is_v7))
                  else jnp.float32)

    dim_sem = (pltpu.CORE_PARALLEL,) if is_v7 else ("parallel",)

    out_shapes = (
        jax.ShapeDtypeStruct((B_pad, D), jnp.float32),
        jax.ShapeDtypeStruct((B_pad, S), jnp.float32),
    )

    grid_spec = pltpu.PrefetchScalarGridSpec(
        num_scalar_prefetch=0,
        grid=grid,
        in_specs=[
            pl.BlockSpec((TB, S, D), lambda i: (i, 0, 0)),   # batch tile
            pl.BlockSpec((D, D), lambda i: (0, 0)),          # shared weights
            pl.BlockSpec((1, D), lambda i: (0, 0)),
            pl.BlockSpec((1, D), lambda i: (0, 0)),
        ],
        out_specs=[
            pl.BlockSpec((TB, D), lambda i: (i, 0)),
            pl.BlockSpec((TB, S), lambda i: (i, 0)),
        ],
    )

    weighted, attw = pl.pallas_call(
        functools.partial(_attention_kernel, tanh_dtype=tanh_dtype),
        out_shape=out_shapes,
        grid_spec=grid_spec,
        compiler_params=pltpu.CompilerParams(
            dimension_semantics=dim_sem,
            vmem_limit_bytes=vmem_limit,
        ),
    )(x, wT, b2d, v2d)

    if B_pad != B:
        weighted = weighted[:B]
        attw = attw[:B]
    return weighted, attw


def attention_ref(lstm_outputs, attn_weight, attn_bias, ctx_weight):
    """Pure-JAX reference matching the PyTorch forward (f32 end to end)."""
    h = jnp.tanh(jnp.einsum("bsd,od->bso", lstm_outputs, attn_weight) + attn_bias)
    scores = jnp.einsum("bsd,od->bso", h, ctx_weight)[..., 0]       # (B, S)
    attw = jax.nn.softmax(scores, axis=1)
    weighted = jnp.sum(lstm_outputs * attw[..., None], axis=1)      # (B, D)
    return weighted, attw


if __name__ == "__main__":
    # Small shapes consistent with the module: hidden_dim=128 -> D = 256.
    hidden_dim = 128
    D = hidden_dim * 2
    B, S = 16, 8

    key = jax.random.PRNGKey(0)
    kx, kw, kb, kv = jax.random.split(key, 4)

    lstm_outputs = jax.random.normal(kx, (B, S, D), dtype=jnp.float32)

    # Deterministic parameter init (mimics nn.Linear shapes / bounds).
    bound = 1.0 / jnp.sqrt(jnp.float32(D))
    attn_weight = jax.random.uniform(kw, (D, D), jnp.float32, -bound, bound)
    attn_bias = jax.random.uniform(kb, (D,), jnp.float32, -bound, bound)
    ctx_weight = jax.random.uniform(kv, (1, D), jnp.float32, -bound, bound)

    ref_weighted, ref_attw = attention_ref(lstm_outputs, attn_weight,
                                           attn_bias, ctx_weight)

    # 1) Full-precision path: f32 stream, f32 tanh, exact softmax divide.
    w_f32, a_f32 = attention_forward(lstm_outputs, attn_weight, attn_bias,
                                     ctx_weight, cast_inputs_to_bf16=False)
    jax.block_until_ready((w_f32, a_f32))
    assert w_f32.shape == (B, D) and a_f32.shape == (B, S)
    assert jnp.allclose(w_f32, ref_weighted, atol=1e-4, rtol=1e-4)
    assert jnp.allclose(a_f32, ref_attw, atol=1e-4, rtol=1e-4)
    assert jnp.allclose(jnp.sum(a_f32, axis=1), 1.0, atol=1e-5)

    # 2) Default fast path: bf16 x / W stream (and bf16 tanh on v6e/v7x).
    w_bf, a_bf = attention_forward(lstm_outputs, attn_weight, attn_bias,
                                   ctx_weight)  # cast_inputs_to_bf16=True
    jax.block_until_ready((w_bf, a_bf))
    assert w_bf.shape == (B, D) and a_bf.shape == (B, S)
    assert jnp.allclose(w_bf, ref_weighted, atol=3e-2, rtol=3e-2)
    assert jnp.allclose(a_bf, ref_attw, atol=3e-2, rtol=3e-2)
    assert jnp.allclose(jnp.sum(a_bf, axis=1), 1.0, atol=1e-3)

    print("KERNEL_OK")
</pallas_src>

<mosaic_0001>
module attributes {stable_mosaic.version = 11 : i64} {
  func.func @_attention_kernel(%arg0: i32, %arg1: memref<8x8x256xf32, #tpu.memory_space<vmem>>, %arg2: memref<256x256xf32, #tpu.memory_space<vmem>>, %arg3: memref<1x256xf32, #tpu.memory_space<vmem>>, %arg4: memref<1x256xf32, #tpu.memory_space<vmem>>, %arg5: memref<8x256xf32, #tpu.memory_space<vmem>>, %arg6: memref<8x8xf32, #tpu.memory_space<vmem>>) attributes {dimension_semantics = [#tpu.dimension_semantics<parallel>], iteration_bounds = array<i64: 2>, scalar_prefetch = 0 : i64, scratch_operands = 0 : i64, tpu.core_type = #tpu.core_type<tc>, window_params = [{transform_indices = @transform_0, window_bounds = array<i64: 8, 8, 256>}, {pipeline_mode = #tpu.pipeline_mode<synchronous>, transform_indices = @transform_1, window_bounds = array<i64: 256, 256>}, {pipeline_mode = #tpu.pipeline_mode<synchronous>, transform_indices = @transform_2, window_bounds = array<i64: 1, 256>}, {pipeline_mode = #tpu.pipeline_mode<synchronous>, transform_indices = @transform_3, window_bounds = array<i64: 1, 256>}, {transform_indices = @transform_4, window_bounds = array<i64: 8, 256>}, {transform_indices = @transform_5, window_bounds = array<i64: 8, 8>}]} {
    %c0 = arith.constant 0 : index
    %c0_0 = arith.constant 0 : index
    %c0_1 = arith.constant 0 : index
    %0 = vector.load %arg1[%c0, %c0_0, %c0_1] : memref<8x8x256xf32, #tpu.memory_space<vmem>>, vector<8x8x256xf32>
    %1 = vector.shape_cast %0 : vector<8x8x256xf32> to vector<64x256xf32>
    %c0_2 = arith.constant 0 : index
    %c0_3 = arith.constant 0 : index
    %2 = vector.load %arg2[%c0_2, %c0_3] : memref<256x256xf32, #tpu.memory_space<vmem>>, vector<256x256xf32>
    %cst = arith.constant dense<0.000000e+00> : vector<64x256xf32>
    %3 = tpu.matmul %1, %2, %cst {dimension_numbers = #tpu.dot_dimension_numbers<[1], [0], [0], [1], [0, 0, 1, 1], [], []>} : vector<64x256xf32>, vector<256x256xf32>, vector<64x256xf32> -> vector<64x256xf32>
    %c0_4 = arith.constant 0 : index
    %c0_5 = arith.constant 0 : index
    %4 = vector.load %arg3[%c0_4, %c0_5] : memref<1x256xf32, #tpu.memory_space<vmem>>, vector<1x256xf32>
    %5 = vector.broadcast %4 : vector<1x256xf32> to vector<64x256xf32>
    %6 = arith.addf %3, %5 : vector<64x256xf32>
    %7 = math.tanh %6 : vector<64x256xf32>
    %8 = vector.shape_cast %7 : vector<64x256xf32> to vector<8x8x256xf32>
    %c0_6 = arith.constant 0 : index
    %c0_7 = arith.constant 0 : index
    %9 = vector.load %arg4[%c0_6, %c0_7] : memref<1x256xf32, #tpu.memory_space<vmem>>, vector<1x256xf32>
    %10 = vector.shape_cast %9 : vector<1x256xf32> to vector<1x1x256xf32>
    %11 = vector.broadcast %10 : vector<1x1x256xf32> to vector<8x8x256xf32>
    %12 = arith.mulf %8, %11 : vector<8x8x256xf32>
    %cst_8 = arith.constant dense<0.000000e+00> : vector<8x8xf32>
    %13 = vector.multi_reduction <add>, %12, %cst_8 [2] : vector<8x8x256xf32> to vector<8x8xf32>
    %cst_9 = arith.constant dense<0xFF800000> : vector<8xf32>
    %14 = vector.multi_reduction <maximumf>, %13, %cst_9 [1] : vector<8x8xf32> to vector<8xf32>
    %15 = vector.shape_cast %14 : vector<8xf32> to vector<8x1xf32>
    %16 = vector.broadcast %15 : vector<8x1xf32> to vector<8x8xf32>
    %17 = arith.subf %13, %16 : vector<8x8xf32>
    %18 = math.exp %17 : vector<8x8xf32>
    %cst_10 = arith.constant dense<0.000000e+00> : vector<8xf32>
    %19 = vector.multi_reduction <add>, %18, %cst_10 [1] : vector<8x8xf32> to vector<8xf32>
    %20 = vector.shape_cast %19 : vector<8xf32> to vector<8x1xf32>
    %21 = vector.broadcast %20 : vector<8x1xf32> to vector<8x8xf32>
    %22 = arith.divf %18, %21 : vector<8x8xf32>
    %23 = vector.shape_cast %22 : vector<8x8xf32> to vector<8x8x1xf32>
    %24 = vector.broadcast %23 : vector<8x8x1xf32> to vector<8x8x256xf32>
    %25 = arith.mulf %0, %24 : vector<8x8x256xf32>
    %cst_11 = arith.constant dense<0.000000e+00> : vector<8x256xf32>
    %26 = vector.multi_reduction <add>, %25, %cst_11 [1] : vector<8x8x256xf32> to vector<8x256xf32>
    %c0_12 = arith.constant 0 : index
    %c0_13 = arith.constant 0 : index
    %27 = vector.load %arg5[%c0_12, %c0_13] : memref<8x256xf32, #tpu.memory_space<vmem>>, vector<8x256xf32>
    tpu.vector_store %arg5[%c0_12, %c0_13], %26 {strides = array<i32>} : memref<8x256xf32, #tpu.memory_space<vmem>>, vector<8x256xf32>,
    %c0_14 = arith.constant 0 : index
    %c0_15 = arith.constant 0 : index
    %28 = vector.load %arg6[%c0_14, %c0_15] : memref<8x8xf32, #tpu.memory_space<vmem>>, vector<8x8xf32>
    tpu.vector_store %arg6[%c0_14, %c0_15], %22 {strides = array<i32>} : memref<8x8xf32, #tpu.memory_space<vmem>>, vector<8x8xf32>,
    return
  }
  func.func @transform_0(%arg0: i32) -> (i32, i32, i32) {
    %c0_i32 = arith.constant 0 : i32
    %c0_i32_0 = arith.constant 0 : i32
    %c0_i32_1 = arith.constant 0 : i32
    return %arg0, %c0_i32, %c0_i32_0 : i32, i32, i32
  }
  func.func @transform_1(%arg0: i32) -> (i32, i32) {
    %c0_i32 = arith.constant 0 : i32
    %c0_i32_0 = arith.constant 0 : i32
    %c0_i32_1 = arith.constant 0 : i32
    return %c0_i32, %c0_i32_0 : i32, i32
  }
  func.func @transform_2(%arg0: i32) -> (i32, i32) {
    %c0_i32 = arith.constant 0 : i32
    %c0_i32_0 = arith.constant 0 : i32
    %c0_i32_1 = arith.constant 0 : i32
    return %c0_i32, %c0_i32_0 : i32, i32
  }
  func.func @transform_3(%arg0: i32) -> (i32, i32) {
    %c0_i32 = arith.constant 0 : i32
    %c0_i32_0 = arith.constant 0 : i32
    %c0_i32_1 = arith.constant 0 : i32
    return %c0_i32, %c0_i32_0 : i32, i32
  }
  func.func @transform_4(%arg0: i32) -> (i32, i32) {
    %c0_i32 = arith.constant 0 : i32
    %c0_i32_0 = arith.constant 0 : i32
    return %arg0, %c0_i32 : i32, i32
  }
  func.func @transform_5(%arg0: i32) -> (i32, i32) {
    %c0_i32 = arith.constant 0 : i32
    %c0_i32_0 = arith.constant 0 : i32
    return %arg0, %c0_i32 : i32, i32
  }
}

</mosaic_0001>

<llo_original>
// kernel: tpu_custom_call.1
$region0: #{tpu_custom_call.1}
  #allocation0 [shape = 'u32[]', space=smem, size = 0x4, offset = 0x4, fixed_abs, tag = 'smem constant byte address 0x4 - core index']
  #allocation1 [shape = 'u32[144,128]{1,0:T(1,128)}', space=vmem, size = 0x12000, scoped, tag = 'internal scratch']
  %s0 = inlined_call_operand.hbm [shape: f32[16,8,256], index: 0, kind: input, shape index: {}]
  %s1 = inlined_call_operand.hbm [shape: f32[256,256], index: 1, kind: input, shape index: {}]
  %s2 = inlined_call_operand.vmem [shape: f32[1,256], index: 2, kind: input, shape index: {}]
  %s3 = inlined_call_operand.vmem [shape: f32[1,256], index: 3, kind: input, shape index: {}]
  %s4 = inlined_call_operand.hbm [shape: f32[16,256], index: 4, kind: output, shape index: {0}]
  %s5 = inlined_call_operand.vmem [shape: f32[16,8], index: 5, kind: output, shape index: {1}]
  %6 = xla_tuple %s4, %s5
  %s7 = sld [smem:[#allocation0]]
  $region65: #{tpu_custom_call.1} parent=0
    _
  %s9 = ssub.s32 1, %s7
  %s10 = scalar_select 0, %s9, %s7
  $region1: #{tpu_custom_call.1} parent=0
    #allocation2 [shape = 'u8[131072]{0}', space=vmem, size = 0x20000, scoped, tag = 'input window, operand 0']
    #allocation3 [shape = 's32[2]{0}', space=sflag, size = 0x8, scoped, tag = 'scoped memory for tpu_custom_call.1']
    #allocation4 [shape = 's32[2]{0}', space=sflag, size = 0x8, scoped, tag = 'scoped memory for tpu_custom_call.1']
    #allocation5 [shape = 'u8[262144]{0}', space=vmem, size = 0x40000, scoped, tag = 'input window, operand 1, single buffered']
    #allocation6 [shape = 's32[1]{0}', space=sflag, size = 0x4, scoped, tag = 'scoped memory for tpu_custom_call.1']
    #allocation7 [shape = 'u8[16384]{0}', space=vmem, size = 0x4000, scoped, tag = 'output window, operand 0']
    %11 = vsyncpa [#allocation3], 0
    %s12 = scalar_lea.sflag [#allocation3], 1
    %13 = vsyncpa %s12, 0
    %14 = vsyncpa [#allocation6], 0
    %15 = vsyncpa [#allocation4], 0
    %s16 = scalar_lea.sflag [#allocation4], 1
    %17 = vsyncpa %s16, 0
    loop: start=0, step=1, limit=4
    $region2: #{tpu_custom_call.1} parent=1 // loop_pre_header
      _
    $region3: #{tpu_custom_call.1} parent=1 // loop_header
      %s19 = sphi 0, %s23
      %p20 = scmp.ge.s32.totalorder %s19, 4
      %s29 = sphi 0, %s31
      %s32 = sphi 0, %s29
      %s33 = sphi 0, %s32
      %s49 = sphi 0, %s33
      %s53 = sphi 0, %s53
      %s55 = sphi 0, %s53
      %s56 = sphi 0, %s55
      %s70 = sphi 0, %s56
      %s74 = sphi 0, %s74
      %s76 = sphi 0, %s74
      %s77 = sphi 0, %s76
      %s91 = sphi 0, %s77
      %s95 = sphi 0, %s95
      %s97 = sphi 0, %s95
      %s98 = sphi 0, %s97
      %s112 = sphi 0, %s98
      %s118 = sphi 0, %s120
      %s121 = sphi 0, %s118
      %s122 = sphi 0, %s121
      %s138 = sphi 0, %s122
      %s144 = sphi 0, %s146
      %s147 = sphi 0, %s144
      %s148 = sphi 0, %s147
      %s164 = sphi 0, %s148
    $region4: #{tpu_custom_call.1} parent=1 // loop_header_branch
      %22 = sbr.rel (%p20) target = $region8
    $region5: #{tpu_custom_call.1} parent=1 // loop_body
      %s24 = ssub.s32 %s19, 1
      %s25 = ssub.s32 %s19, 2
      %s26 = sadd.s32 %s19, 1
      %s27 = ssub.s32 %s19, %s26
      %p28 = scmp.eq.s32.totalorder %s27, 0
      %s30 = sadd.s32 %s29, 1
      %s31 = scalar_select %p28, %s29, %s30
      %p34 = pneg %p28
      %p35 = scmp.eq.s32.totalorder %s19, 1
      %p36 = por %p34, %p35
      %p37 = scmp.ne.s32.totalorder %s29, %s32
      %p38 = scmp.eq.s32.totalorder %s19, 0
      %p39 = por %p37, %p38
      %p40 = scmp.ne.s32.totalorder %s29, %s32
      %p41 = scmp.eq.s32.totalorder %s24, 1
      %p42 = por %p40, %p41
      %p43 = scmp.ne.s32.totalorder %s32, %s33
      %p44 = scmp.eq.s32.totalorder %s24, 0
      %p45 = por %p43, %p44
      %p46 = scmp.ne.s32.totalorder %s32, %s33
      %p47 = scmp.eq.s32.totalorder %s25, 1
      %p48 = por %p46, %p47
      %p50 = scmp.ne.s32.totalorder %s33, %s49
      %p51 = scmp.eq.s32.totalorder %s25, 0
      %p52 = por %p50, %p51
      %s54 = sadd.s32 %s53, 1
      %p57 = scmp.eq.s32.totalorder %s19, 1
      %p58 = scmp.ne.s32.totalorder %s53, %s55
      %p59 = scmp.eq.s32.totalorder %s19, 0
      %p60 = por %p58, %p59
      %p61 = scmp.ne.s32.totalorder %s53, %s55
      %p62 = scmp.eq.s32.totalorder %s24, 1
      %p63 = por %p61, %p62
      %p64 = scmp.ne.s32.totalorder %s55, %s56
      %p65 = scmp.eq.s32.totalorder %s24, 0
      %p66 = por %p64, %p65
      %p67 = scmp.ne.s32.totalorder %s55, %s56
      %p68 = scmp.eq.s32.totalorder %s25, 1
      %p69 = por %p67, %p68
      %p71 = scmp.ne.s32.totalorder %s56, %s70
      %p72 = scmp.eq.s32.totalorder %s25, 0
      %p73 = por %p71, %p72
      %s75 = sadd.s32 %s74, 1
      %p78 = scmp.eq.s32.totalorder %s19, 1
      %p79 = scmp.ne.s32.totalorder %s74, %s76
      %p80 = scmp.eq.s32.totalorder %s19, 0
      %p81 = por %p79, %p80
      %p82 = scmp.ne.s32.totalorder %s74, %s76
      %p83 = scmp.eq.s32.totalorder %s24, 1
      %p84 = por %p82, %p83
      %p85 = scmp.ne.s32.totalorder %s76, %s77
      %p86 = scmp.eq.s32.totalorder %s24, 0
      %p87 = por %p85, %p86
      %p88 = scmp.ne.s32.totalorder %s76, %s77
      %p89 = scmp.eq.s32.totalorder %s25, 1
      %p90 = por %p88, %p89
      %p92 = scmp.ne.s32.totalorder %s77, %s91
      %p93 = scmp.eq.s32.totalorder %s25, 0
      %p94 = por %p92, %p93
      %s96 = sadd.s32 %s95, 1
      %p99 = scmp.eq.s32.totalorder %s19, 1
      %p100 = scmp.ne.s32.totalorder %s95, %s97
      %p101 = scmp.eq.s32.totalorder %s19, 0
      %p102 = por %p100, %p101
      %p103 = scmp.ne.s32.totalorder %s95, %s97
      %p104 = scmp.eq.s32.totalorder %s24, 1
      %p105 = por %p103, %p104
      %p106 = scmp.ne.s32.totalorder %s97, %s98
      %p107 = scmp.eq.s32.totalorder %s24, 0
      %p108 = por %p106, %p107
      %p109 = scmp.ne.s32.totalorder %s97, %s98
      %p110 = scmp.eq.s32.totalorder %s25, 1
      %p111 = por %p109, %p110
      %p113 = scmp.ne.s32.totalorder %s98, %s112
      %p114 = scmp.eq.s32.totalorder %s25, 0
      %p115 = por %p113, %p114
      %s116 = ssub.s32 %s19, %s26
      %p117 = scmp.eq.s32.totalorder %s116, 0
      %s119 = sadd.s32 %s118, 1
      %s120 = scalar_select %p117, %s118, %s119
      %p123 = pneg %p117
      %p124 = scmp.eq.s32.totalorder %s19, 1
      %p125 = por %p123, %p124
      %p126 = scmp.ne.s32.totalorder %s118, %s121
      %p127 = scmp.eq.s32.totalorder %s19, 0
      %p128 = por %p126, %p127
      %p129 = scmp.ne.s32.totalorder %s118, %s121
      %p130 = scmp.eq.s32.totalorder %s24, 1
      %p131 = por %p129, %p130
      %p132 = scmp.ne.s32.totalorder %s121, %s122
      %p133 = scmp.eq.s32.totalorder %s24, 0
      %p134 = por %p132, %p133
      %p135 = scmp.ne.s32.totalorder %s121, %s122
      %p136 = scmp.eq.s32.totalorder %s25, 1
      %p137 = por %p135, %p136
      %p139 = scmp.ne.s32.totalorder %s122, %s138
      %p140 = scmp.eq.s32.totalorder %s25, 0
      %p141 = por %p139, %p140
      %s142 = ssub.s32 %s19, %s26
      %p143 = scmp.eq.s32.totalorder %s142, 0
      %s145 = sadd.s32 %s144, 1
      %s146 = scalar_select %p143, %s144, %s145
      %p149 = pneg %p143
      %p150 = scmp.eq.s32.totalorder %s19, 1
      %p151 = por %p149, %p150
      %p152 = scmp.ne.s32.totalorder %s144, %s147
      %p153 = scmp.eq.s32.totalorder %s19, 0
      %p154 = por %p152, %p153
      %p155 = scmp.ne.s32.totalorder %s144, %s147
      %p156 = scmp.eq.s32.totalorder %s24, 1
      %p157 = por %p155, %p156
      %p158 = scmp.ne.s32.totalorder %s147, %s148
      %p159 = scmp.eq.s32.totalorder %s24, 0
      %p160 = por %p158, %p159
      %p161 = scmp.ne.s32.totalorder %s147, %s148
      %p162 = scmp.eq.s32.totalorder %s25, 1
      %p163 = por %p161, %p162
      %p165 = scmp.ne.s32.totalorder %s148, %s164
      %p166 = scmp.eq.s32.totalorder %s25, 0
      %p167 = por %p165, %p166
      %p168 = scmp.le.s32.totalorder 1, %s19
      %p169 = scmp.lt.s32.totalorder %s19, 3
      %p170 = pnand %p168, %p169
      %p171 = pneg %p170
      // Predicated region
      $region9: #{tpu_custom_call.1} parent=5 // pred_check
        _
      $region10: #{tpu_custom_call.1} parent=5 // pred_check_branch
        %173 = sbr.rel (%p170) target = $region12
      $region11: #{tpu_custom_call.1} parent=5 // pred_region
        %s174 = ssub.s32 %s19, 1
        // Predicated region
        $region13: #{tpu_custom_call.1} parent=11 // pred_check
          %p175 = pneg %p66
        $region14: #{tpu_custom_call.1} parent=11 // pred_check_branch
          %177 = sbr.rel (%p175) target = $region16
        $region15: #{tpu_custom_call.1} parent=11 // pred_region
          %s179 = ssub.s32 8192, 8192
          %180 = vsyncadd [#allocation6], %s179
          %s181 = sshll.u32 [#allocation5], 4
          %s182 = int_to_ptr.vmem [resolvable:$true] %s181
          %187 = dma.hbm_to_vmem [thread:$0]  %s1, 8192, %s182, [#allocation6], 256, 256, 16
        $region16: #{tpu_custom_call.1} parent=11 // pred_fallthru
          _
        // Predicated region
        $region17: #{tpu_custom_call.1} parent=11 // pred_check
          %p188 = pneg %p87
        $region18: #{tpu_custom_call.1} parent=11 // pred_check_branch
          %190 = sbr.rel (%p188) target = $region20
        $region19: #{tpu_custom_call.1} parent=11 // pred_region
          _
        $region20: #{tpu_custom_call.1} parent=11 // pred_fallthru
          _
        // Predicated region
        $region21: #{tpu_custom_call.1} parent=11 // pred_check
          %p191 = pneg %p108
        $region22: #{tpu_custom_call.1} parent=11 // pred_check_branch
          %193 = sbr.rel (%p191) target = $region24
        $region23: #{tpu_custom_call.1} parent=11 // pred_region
          _
        $region24: #{tpu_custom_call.1} parent=11 // pred_fallthru
          _
      $region12: #{tpu_custom_call.1} parent=5 // pred_fallthru
        _
      %p194 = scmp.lt.s32.totalorder %s19, 2
      // Predicated region
      $region25: #{tpu_custom_call.1} parent=5 // pred_check
        %p195 = pneg %p194
      $region26: #{tpu_custom_call.1} parent=5 // pred_check_branch
        %197 = sbr.rel (%p195) target = $region28
      $region27: #{tpu_custom_call.1} parent=5 // pred_region
        // Predicated region
        $region29: #{tpu_custom_call.1} parent=27 // pred_check
          %p198 = pneg %p39
        $region30: #{tpu_custom_call.1} parent=27 // pred_check_branch
          %200 = sbr.rel (%p198) target = $region32
        $region31: #{tpu_custom_call.1} parent=27 // pred_region
          %s201 = sand.u32 %s29, 1
          %s202 = scalar_lea.sflag [#allocation3], %s201
          %s203 = sand.u32 %s29, 1
          %s204 = smul.addr %s203, 128
          %s205 = scalar_lea.vmem [#allocation2], %s204
          %s206 = smul.u32 8, %s19
          %s208 = ssub.s32 2048, 2048
          %209 = vsyncadd %s202, %s208
          %s210 = smul.addr %s206, 2
          %s211 = smul.addr %s210, 128
          %s212 = scalar_lea.hbm %s0, %s211
          %s213 = sshll.u32 %s205, 4
          %s214 = int_to_ptr.vmem [resolvable:$true] %s213
          %219 = dma.hbm_to_vmem [thread:$0]  %s212, 2048, %s214, %s202, 256, 256, 16
        $region32: #{tpu_custom_call.1} parent=27 // pred_fallthru
          _
      $region28: #{tpu_custom_call.1} parent=5 // pred_fallthru
        _
      %p220 = scmp.le.s32.totalorder 1, %s19
      %p221 = scmp.lt.s32.totalorder %s19, 3
      %p222 = pnand %p220, %p221
      %p223 = pneg %p222
      // Predicated region
      $region33: #{tpu_custom_call.1} parent=5 // pred_check
        _
      $region34: #{tpu_custom_call.1} parent=5 // pred_check_branch
        %225 = sbr.rel (%p222) target = $region36
      $region35: #{tpu_custom_call.1} parent=5 // pred_region
        %s226 = ssub.s32 %s19, 1
        %s227 = sand.u32 %s32, 1
        %s228 = scalar_lea.sflag [#allocation3], %s227
        %s229 = sand.u32 %s32, 1
        %s230 = smul.addr %s229, 128
        %s231 = scalar_lea.vmem [#allocation2], %s230
        // Predicated region
        $region37: #{tpu_custom_call.1} parent=35 // pred_check
          %p232 = pneg %p45
        $region38: #{tpu_custom_call.1} parent=35 // pred_check_branch
          %234 = sbr.rel (%p232) target = $region40
        $region39: #{tpu_custom_call.1} parent=35 // pred_region
          %235 = dma.done %s228, 2048
        $region40: #{tpu_custom_call.1} parent=35 // pred_fallthru
          _
        // Predicated region
        $region41: #{tpu_custom_call.1} parent=35 // pred_check
          %p236 = pneg %p66
        $region42: #{tpu_custom_call.1} parent=35 // pred_check_branch
          %238 = sbr.rel (%p236) target = $region44
        $region43: #{tpu_custom_call.1} parent=35 // pred_region
          %239 = dma.done [#allocation6], 8192
        $region44: #{tpu_custom_call.1} parent=35 // pred_fallthru
          _
        %s240 = sand.u32 %s32, 1
        %s241 = scalar_lea.sflag [#allocation3], %s240
        %s242 = sand.u32 %s32, 1
        %s243 = smul.addr %s242, 128
        %s244 = scalar_lea.vmem [#allocation2], %s243
        %p245 = pneg %p45
        %p246 = pneg %p42
        %p247 = pneg %p66
        %p248 = pneg %p63
        %p249 = pneg %p87
        %p250 = pneg %p84
        %p251 = pneg %p108
        %p252 = pneg %p105
        %p253 = pneg %p134
        %p254 = pneg %p131
        %s255 = sand.u32 %s121, 1
        %s256 = scalar_lea.sflag [#allocation4], %s255
        %s257 = sand.u32 %s121, 1
        %s258 = smul.addr %s257, 16
        %s259 = scalar_lea.vmem [#allocation7], %s258
        %p260 = pneg %p160
        %p261 = pneg %p157
        %p262 = scmp.lt.s32.totalorder %s24, 1
        %s263 = scalar_select %p262, %s24, 1
        %s264 = smul.addr %s263, 8
        %s265 = scalar_lea.vmem %s5, %s264
        %s266 = smul.u32 8, %s24
        %p267 = scmp.lt.s32.totalorder %s24, 1
        %s268 = scalar_select %p267, %s24, 1
        %s269 = smul.addr %s268, 8
        %s270 = scalar_lea.vmem %s5, %s269
        %v271 = vld [vmem:[%s231] sm:$0xff]
        %v272 = vld [vmem:[%s231 + $0x8] sm:$0xff]
        %v273 = vld [vmem:[%s231 + $0x10] sm:$0xff]
        %v274 = vld [vmem:[%s231 + $0x18] sm:$0xff]
        %v275 = vld [vmem:[%s231 + $0x20] sm:$0xff]
        %v276 = vld [vmem:[%s231 + $0x28] sm:$0xff]
        %v277 = vld [vmem:[%s231 + $0x30] sm:$0xff]
        %v278 = vld [vmem:[%s231 + $0x38] sm:$0xff]
        %v279 = vld [vmem:[%s231 + $0x40] sm:$0xff]
        %v280 = vld [vmem:[%s231 + $0x48] sm:$0xff]
        %v281 = vld [vmem:[%s231 + $0x50] sm:$0xff]
        %v282 = vld [vmem:[%s231 + $0x58] sm:$0xff]
        %v283 = vld [vmem:[%s231 + $0x60] sm:$0xff]
        %v284 = vld [vmem:[%s231 + $0x68] sm:$0xff]
        %v285 = vld [vmem:[%s231 + $0x70] sm:$0xff]
        %v286 = vld [vmem:[%s231 + $0x78] sm:$0xff]
        %v287 = vld [vmem:[#allocation5] sm:$0xff]
        %v288 = vld [vmem:[#allocation5 + $0x8] sm:$0xff]
        %v289 = vld [vmem:[#allocation5 + $0x10] sm:$0xff]
        %v290 = vld [vmem:[#allocation5 + $0x18] sm:$0xff]
        %v291 = vld [vmem:[#allocation5 + $0x20] sm:$0xff]
        %v292 = vld [vmem:[#allocation5 + $0x28] sm:$0xff]
        %v293 = vld [vmem:[#allocation5 + $0x30] sm:$0xff]
        %v294 = vld [vmem:[#allocation5 + $0x38] sm:$0xff]
        %v295 = vld [vmem:[#allocation5 + $0x40] sm:$0xff]
        %v296 = vld [vmem:[#allocation5 + $0x48] sm:$0xff]
        %v297 = vld [vmem:[#allocation5 + $0x50] sm:$0xff]
        %v298 = vld [vmem:[#allocation5 + $0x58] sm:$0xff]
        %v299 = vld [vmem:[#allocation5 + $0x60] sm:$0xff]
        %v300 = vld [vmem:[#allocation5 + $0x68] sm:$0xff]
        %v301 = vld [vmem:[#allocation5 + $0x70] sm:$0xff]
        %v302 = vld [vmem:[#allocation5 + $0x78] sm:$0xff]
        %v303 = vld [vmem:[#allocation5 + $0x80] sm:$0xff]
        %v304 = vld [vmem:[#allocation5 + $0x88] sm:$0xff]
        %v305 = vld [vmem:[#allocation5 + $0x90] sm:$0xff]
        %v306 = vld [vmem:[#allocation5 + $0x98] sm:$0xff]
        %v307 = vld [vmem:[#allocation5 + $0xa0] sm:$0xff]
        %v308 = vld [vmem:[#allocation5 + $0xa8] sm:$0xff]
        %v309 = vld [vmem:[#allocation5 + $0xb0] sm:$0xff]
        %v310 = vld [vmem:[#allocation5 + $0xb8] sm:$0xff]
        %v311 = vld [vmem:[#allocation5 + $0xc0] sm:$0xff]
        %v312 = vld [vmem:[#allocation5 + $0xc8] sm:$0xff]
        %v313 = vld [vmem:[#allocation5 + $0xd0] sm:$0xff]
        %v314 = vld [vmem:[#allocation5 + $0xd8] sm:$0xff]
        %v315 = vld [vmem:[#allocation5 + $0xe0] sm:$0xff]
        %v316 = vld [vmem:[#allocation5 + $0xe8] sm:$0xff]
        %v317 = vld [vmem:[#allocation5 + $0xf0] sm:$0xff]
        %v318 = vld [vmem:[#allocation5 + $0xf8] sm:$0xff]
        %v319 = vld [vmem:[#allocation5 + $0x100] sm:$0xff]
        %v320 = vld [vmem:[#allocation5 + $0x108] sm:$0xff]
        %v321 = vld [vmem:[#allocation5 + $0x110] sm:$0xff]
        %v322 = vld [vmem:[#allocation5 + $0x118] sm:$0xff]
        %v323 = vld [vmem:[#allocation5 + $0x120] sm:$0xff]
        %v324 = vld [vmem:[#allocation5 + $0x128] sm:$0xff]
        %v325 = vld [vmem:[#allocation5 + $0x130] sm:$0xff]
        %v326 = vld [vmem:[#allocation5 + $0x138] sm:$0xff]
        %v327 = vld [vmem:[#allocation5 + $0x140] sm:$0xff]
        %v328 = vld [vmem:[#allocation5 + $0x148] sm:$0xff]
        %v329 = vld [vmem:[#allocation5 + $0x150] sm:$0xff]
        %v330 = vld [vmem:[#allocation5 + $0x158] sm:$0xff]
        %v331 = vld [vmem:[#allocation5 + $0x160] sm:$0xff]
        %v332 = vld [vmem:[#allocation5 + $0x168] sm:$0xff]
        %v333 = vld [vmem:[#allocation5 + $0x170] sm:$0xff]
        %v334 = vld [vmem:[#allocation5 + $0x178] sm:$0xff]
        %v335 = vld [vmem:[#allocation5 + $0x180] sm:$0xff]
        %v336 = vld [vmem:[#allocation5 + $0x188] sm:$0xff]
        %v337 = vld [vmem:[#allocation5 + $0x190] sm:$0xff]
        %v338 = vld [vmem:[#allocation5 + $0x198] sm:$0xff]
        %v339 = vld [vmem:[#allocation5 + $0x1a0] sm:$0xff]
        %v340 = vld [vmem:[#allocation5 + $0x1a8] sm:$0xff]
        %v341 = vld [vmem:[#allocation5 + $0x1b0] sm:$0xff]
        %v342 = vld [vmem:[#allocation5 + $0x1b8] sm:$0xff]
        %v343 = vld [vmem:[#allocation5 + $0x1c0] sm:$0xff]
        %v344 = vld [vmem:[#allocation5 + $0x1c8] sm:$0xff]
        %v345 = vld [vmem:[#allocation5 + $0x1d0] sm:$0xff]
        %v346 = vld [vmem:[#allocation5 + $0x1d8] sm:$0xff]
        %v347 = vld [vmem:[#allocation5 + $0x1e0] sm:$0xff]
        %v348 = vld [vmem:[#allocation5 + $0x1e8] sm:$0xff]
        %v349 = vld [vmem:[#allocation5 + $0x1f0] sm:$0xff]
        %v350 = vld [vmem:[#allocation5 + $0x1f8] sm:$0xff]
        %v351 = vld [vmem:[%s2] sm:$0x3]
        %v353 = vlaneseq
        %v354 = vshrl.u32 %v353, 7
        %v355 = vsub.s32 0, %v354
        %v356 = vrot.slane %v351, %v355
        %v357 = vlaneseq
        %v358 = vshrl.u32 %v357, 7
        %v359 = vsub.s32 1, %v358
        %v360 = vrot.slane %v351, %v359
        %363 = vmatprep.subr.mxu0 %v288
        %364 = vmatpush1.msra.mxu0 %v287
        %365 = vmatprep.subr.mxu0 %v290
        %366 = vmatpush1.msra.mxu0 %v289
        %367 = vmatprep.subr.mxu0 %v292
        %368 = vmatpush1.msra.mxu0 %v291
        %369 = vmatprep.subr.mxu0 %v294
        %370 = vmatpush1.msra.mxu0 %v293
        %371 = vmatprep.subr.mxu0 %v296
        %372 = vmatpush1.msra.mxu0 %v295
        %373 = vmatprep.subr.mxu0 %v298
        %374 = vmatpush1.msra.mxu0 %v297
        %375 = vmatprep.subr.mxu0 %v300
        %376 = vmatpush1.msra.mxu0 %v299
        %377 = vmatprep.subr.mxu0 %v302
        %378 = vmatpush1.msra.mxu0 %v301
        %379 = vmatprep.subr.mxu0 %v304
        %380 = vmatpush1.msra.mxu0 %v303
        %381 = vmatprep.subr.mxu0 %v306
        %382 = vmatpush1.msra.mxu0 %v305
        %383 = vmatprep.subr.mxu0 %v308
        %384 = vmatpush1.msra.mxu0 %v307
        %385 = vmatprep.subr.mxu0 %v310
        %386 = vmatpush1.msra.mxu0 %v309
        %387 = vmatprep.subr.mxu0 %v312
        %388 = vmatpush1.msra.mxu0 %v311
        %389 = vmatprep.subr.mxu0 %v314
        %390 = vmatpush1.msra.mxu0 %v313
        %391 = vmatprep.subr.mxu0 %v316
        %392 = vmatpush1.msra.mxu0 %v315
        %393 = vmatprep.subr.mxu0 %v318
        %394 = vmatpush1.msra.mxu0 %v317
        %395 = vmatprep.subr.mxu0 %v320
        %396 = vmatpush1.msra.mxu0 %v319
        %397 = vmatprep.subr.mxu0 %v322
        %398 = vmatpush1.msra.mxu0 %v321
        %399 = vmatprep.subr.mxu0 %v324
        %400 = vmatpush1.msra.mxu0 %v323
        %401 = vmatprep.subr.mxu0 %v326
        %402 = vmatpush1.msra.mxu0 %v325
        %403 = vmatprep.subr.mxu0 %v328
        %404 = vmatpush1.msra.mxu0 %v327
        %405 = vmatprep.subr.mxu0 %v330
        %406 = vmatpush1.msra.mxu0 %v329
        %407 = vmatprep.subr.mxu0 %v332
        %408 = vmatpush1.msra.mxu0 %v331
        %409 = vmatprep.subr.mxu0 %v334
        %410 = vmatpush1.msra.mxu0 %v333
        %411 = vmatprep.subr.mxu0 %v336
        %412 = vmatpush1.msra.mxu0 %v335
        %413 = vmatprep.subr.mxu0 %v338
        %414 = vmatpush1.msra.mxu0 %v337
        %415 = vmatprep.subr.mxu0 %v340
        %416 = vmatpush1.msra.mxu0 %v339
        %417 = vmatprep.subr.mxu0 %v342
        %418 = vmatpush1.msra.mxu0 %v341
        %419 = vmatprep.subr.mxu0 %v344
        %420 = vmatpush1.msra.mxu0 %v343
        %421 = vmatprep.subr.mxu0 %v346
        %422 = vmatpush1.msra.mxu0 %v345
        %423 = vmatprep.subr.mxu0 %v348
        %424 = vmatpush1.msra.mxu0 %v347
        %425 = vmatprep.subr.mxu0 %v350
        %426 = vmatpush1.msra.mxu0 %v349
        %427 = vmatprep.mubr.f32.mxu0 %v272
        %428 = vmatmul.mubr.f32.gmra.mrb[0].mxu0 %v271
        %v429 = vpop.f32.mrb[0].mxu0
        %v430 = vadd.f32 %v356, %v429
        %v431 = vpop.f32.mrb[0].mxu0
        %v432 = vadd.f32 %v360, %v431
        %433 = vmatprep.mubr.f32.mxu0 %v274
        %434 = vmatmul.mubr.f32.gmra.mrb[0].mxu0 %v273
        %v435 = vpop.f32.mrb[0].mxu0
        %v436 = vadd.f32 %v356, %v435
        %v437 = vpop.f32.mrb[0].mxu0
        %v438 = vadd.f32 %v360, %v437
        %439 = vmatprep.mubr.f32.mxu0 %v276
        %440 = vmatmul.mubr.f32.gmra.mrb[0].mxu0 %v275
        %v441 = vpop.f32.mrb[0].mxu0
        %v442 = vadd.f32 %v356, %v441
        %v443 = vpop.f32.mrb[0].mxu0
        %v444 = vadd.f32 %v360, %v443
        %445 = vmatprep.mubr.f32.mxu0 %v278
        %446 = vmatmul.mubr.f32.gmra.mrb[0].mxu0 %v277
        %v447 = vpop.f32.mrb[0].mxu0
        %v448 = vadd.f32 %v356, %v447
        %v449 = vpop.f32.mrb[0].mxu0
        %v450 = vadd.f32 %v360, %v449
        %451 = vmatprep.mubr.f32.mxu0 %v280
        %452 = vmatmul.mubr.f32.gmra.mrb[0].mxu0 %v279
        %v453 = vpop.f32.mrb[0].mxu0
        %v454 = vadd.f32 %v356, %v453
        %v455 = vpop.f32.mrb[0].mxu0
        %v456 = vadd.f32 %v360, %v455
        %457 = vmatprep.mubr.f32.mxu0 %v282
        %458 = vmatmul.mubr.f32.gmra.mrb[0].mxu0 %v281
        %v459 = vpop.f32.mrb[0].mxu0
        %v460 = vadd.f32 %v356, %v459
        %v461 = vpop.f32.mrb[0].mxu0
        %v462 = vadd.f32 %v360, %v461
        %463 = vmatprep.mubr.f32.mxu0 %v284
        %464 = vmatmul.mubr.f32.gmra.mrb[0].mxu0 %v283
        %v465 = vpop.f32.mrb[0].mxu0
        %v466 = vadd.f32 %v356, %v465
        %v467 = vpop.f32.mrb[0].mxu0
        %v468 = vadd.f32 %v360, %v467
        %469 = vmatprep.mubr.f32.mxu0 %v286
        %470 = vmatmul.mubr.f32.gmra.mrb[0].mxu0 %v285
        %v471 = vpop.f32.mrb[0].mxu0
        %v472 = vadd.f32 %v356, %v471
        %v473 = vpop.f32.mrb[0].mxu0
        %v474 = vadd.f32 %v360, %v473
        %475 = vdwg.mxu0
        %v476 = vtanh.pop %v430
        %v477 = vtanh.pop %v432
        %v478 = vtanh.pop %v436
        %v479 = vtanh.pop %v438
        %v480 = vtanh.pop %v442
        %v481 = vtanh.pop %v444
        %v482 = vtanh.pop %v448
        %v483 = vtanh.pop %v450
        %v484 = vtanh.pop %v454
        %v485 = vtanh.pop %v456
        %v486 = vtanh.pop %v460
        %v487 = vtanh.pop %v462
        %v488 = vtanh.pop %v466
        %v489 = vtanh.pop %v468
        %v490 = vtanh.pop %v472
        %v491 = vtanh.pop %v474
        %v492 = vld [vmem:[%s3] sm:$0x3]
        %v494 = vlaneseq
        %v495 = vshrl.u32 %v494, 7
        %v496 = vsub.s32 0, %v495
        %v497 = vrot.slane %v492, %v496
        %v498 = vlaneseq
        %v499 = vshrl.u32 %v498, 7
        %v500 = vsub.s32 1, %v499
        %v501 = vrot.slane %v492, %v500
        %v504 = vmul.f32 %v476, %v497
        %v505 = vmul.f32 %v477, %v501
        %v506 = vmul.f32 %v478, %v497
        %v507 = vmul.f32 %v479, %v501
        %v508 = vmul.f32 %v480, %v497
        %v509 = vmul.f32 %v481, %v501
        %v510 = vmul.f32 %v482, %v497
        %v511 = vmul.f32 %v483, %v501
        %v512 = vmul.f32 %v484, %v497
        %v513 = vmul.f32 %v485, %v501
        %v514 = vmul.f32 %v486, %v497
        %v515 = vmul.f32 %v487, %v501
        %v516 = vmul.f32 %v488, %v497
        %v517 = vmul.f32 %v489, %v501
        %v518 = vmul.f32 %v490, %v497
        %v519 = vmul.f32 %v491, %v501
        %v520 = vadd.f32 %v504, %v505
        %521 = vadd.xlane.f32.xlu0 %v520
        %v522 = vpop.xlane.xlu0 %521
        %v523 = vadd.f32 %v506, %v507
        %524 = vadd.xlane.f32.xlu0 %v523
        %v525 = vpop.xlane.xlu0 %524
        %v526 = vadd.f32 %v508, %v509
        %527 = vadd.xlane.f32.xlu0 %v526
        %v528 = vpop.xlane.xlu0 %527
        %v529 = vadd.f32 %v510, %v511
        %530 = vadd.xlane.f32.xlu0 %v529
        %v531 = vpop.xlane.xlu0 %530
        %v532 = vadd.f32 %v512, %v513
        %533 = vadd.xlane.f32.xlu0 %v532
        %v534 = vpop.xlane.xlu0 %533
        %v535 = vadd.f32 %v514, %v515
        %536 = vadd.xlane.f32.xlu0 %v535
        %v537 = vpop.xlane.xlu0 %536
        %v538 = vadd.f32 %v516, %v517
        %539 = vadd.xlane.f32.xlu0 %v538
        %v540 = vpop.xlane.xlu0 %539
        %v541 = vadd.f32 %v518, %v519
        %542 = vadd.xlane.f32.xlu0 %v541
        %v543 = vpop.xlane.xlu0 %542
        %v552 = vlaneseq
        %v553 = vand.u32 %v552, 127
        %v554 = vlaneseq
        %v555 = vshrl.u32 %v554, 7
        %v556 = vsub.s32 %v553, %v555
        %v557 = vrot.slane %v522, %v556
        %v558 = vlaneseq
        %v559 = vshrl.u32 %v558, 7
        %v560 = vsub.s32 %v553, %v559
        %v561 = vrot.slane %v525, %v560
        %v562 = vlaneseq
        %v563 = vshrl.u32 %v562, 7
        %v564 = vsub.s32 %v553, %v563
        %v565 = vrot.slane %v528, %v564
        %v566 = vlaneseq
        %v567 = vshrl.u32 %v566, 7
        %v568 = vsub.s32 %v553, %v567
        %v569 = vrot.slane %v531, %v568
        %v570 = vlaneseq
        %v571 = vshrl.u32 %v570, 7
        %v572 = vsub.s32 %v553, %v571
        %v573 = vrot.slane %v534, %v572
        %v574 = vlaneseq
        %v575 = vshrl.u32 %v574, 7
        %v576 = vsub.s32 %v553, %v575
        %v577 = vrot.slane %v537, %v576
        %v578 = vlaneseq
        %v579 = vshrl.u32 %v578, 7
        %v580 = vsub.s32 %v553, %v579
        %v581 = vrot.slane %v540, %v580
        %v582 = vlaneseq
        %v583 = vshrl.u32 %v582, 7
        %v584 = vsub.s32 %v553, %v583
        %v585 = vrot.slane %v543, %v584
        %vm586 = vcmask 1041409
        %v587 = vsel %vm586, %v561, %v557
        %vm588 = vcmask 1042434
        %v589 = vsel %vm588, %v565, %v587
        %vm590 = vcmask 1043459
        %v591 = vsel %vm590, %v569, %v589
        %vm592 = vcmask 1044484
        %v593 = vsel %vm592, %v573, %v591
        %vm594 = vcmask 1045509
        %v595 = vsel %vm594, %v577, %v593
        %vm596 = vcmask 1046534
        %v597 = vsel %vm596, %v581, %v595
        %vm598 = vcmask 1047559
        %v599 = vsel %vm598, %v585, %v597
        %vm601 = vcmask 64512
        %v602 = vsel %vm601, %v599, -inf
        %603 = vmax.xlane.f32.xlu0 %v602
        %v604 = vpop.xlane.xlu0 %603
        %v606 = vlaneseq
        %v607 = vshrl.u32 %v606, 7
        %v608 = vsub.s32 0, %v607
        %v609 = vrot.slane %v604, %v608
        %v610 = vlaneseq
        %v611 = vshrl.u32 %v610, 7
        %v612 = vsub.s32 1, %v611
        %v613 = vrot.slane %v604, %v612
        %v614 = vlaneseq
        %v615 = vshrl.u32 %v614, 7
        %v616 = vsub.s32 2, %v615
        %v617 = vrot.slane %v604, %v616
        %v618 = vlaneseq
        %v619 = vshrl.u32 %v618, 7
        %v620 = vsub.s32 3, %v619
        %v621 = vrot.slane %v604, %v620
        %v622 = vlaneseq
        %v623 = vshrl.u32 %v622, 7
        %v624 = vsub.s32 4, %v623
        %v625 = vrot.slane %v604, %v624
        %v626 = vlaneseq
        %v627 = vshrl.u32 %v626, 7
        %v628 = vsub.s32 5, %v627
        %v629 = vrot.slane %v604, %v628
        %v630 = vlaneseq
        %v631 = vshrl.u32 %v630, 7
        %v632 = vsub.s32 6, %v631
        %v633 = vrot.slane %v604, %v632
        %v634 = vlaneseq
        %v635 = vshrl.u32 %v634, 7
        %v636 = vsub.s32 7, %v635
        %v637 = vrot.slane %v604, %v636
        %v646 = vsub.f32 %v522, %v609
        %v647 = vsub.f32 %v525, %v613
        %v648 = vsub.f32 %v528, %v617
        %v649 = vsub.f32 %v531, %v621
        %v650 = vsub.f32 %v534, %v625
        %v651 = vsub.f32 %v537, %v629
        %v652 = vsub.f32 %v540, %v633
        %v653 = vsub.f32 %v543, %v637
        %v654 = vmul.f32 %v646, 1.442695
        %v655 = vpow.pop %v654
        %v656 = vmul.f32 %v647, 1.442695
        %v657 = vpow.pop %v656
        %v658 = vmul.f32 %v648, 1.442695
        %v659 = vpow.pop %v658
        %v660 = vmul.f32 %v649, 1.442695
        %v661 = vpow.pop %v660
        %v662 = vmul.f32 %v650, 1.442695
        %v663 = vpow.pop %v662
        %v664 = vmul.f32 %v651, 1.442695
        %v665 = vpow.pop %v664
        %v666 = vmul.f32 %v652, 1.442695
        %v667 = vpow.pop %v666
        %v668 = vmul.f32 %v653, 1.442695
        %v669 = vpow.pop %v668
        %678 = vset.pattern.permute.xlu0 0
        %679 = vperm.xlu0 %678, %v655
        %v680 = vpop.permute.xlu0 %679
        %681 = vset.pattern.permute.xlu0 0
        %682 = vperm.xlu0 %681, %v657
        %v683 = vpop.permute.xlu0 %682
        %684 = vset.pattern.permute.xlu0 0
        %685 = vperm.xlu0 %684, %v659
        %v686 = vpop.permute.xlu0 %685
        %687 = vset.pattern.permute.xlu0 0
        %688 = vperm.xlu0 %687, %v661
        %v689 = vpop.permute.xlu0 %688
        %690 = vset.pattern.permute.xlu0 0
        %691 = vperm.xlu0 %690, %v663
        %v692 = vpop.permute.xlu0 %691
        %693 = vset.pattern.permute.xlu0 0
        %694 = vperm.xlu0 %693, %v665
        %v695 = vpop.permute.xlu0 %694
        %696 = vset.pattern.permute.xlu0 0
        %697 = vperm.xlu0 %696, %v667
        %v698 = vpop.permute.xlu0 %697
        %699 = vset.pattern.permute.xlu0 0
        %700 = vperm.xlu0 %699, %v669
        %v701 = vpop.permute.xlu0 %700
        %v702 = vlaneseq
        %v703 = vshrl.u32 %v702, 7
        %v704 = vsub.s32 %v553, %v703
        %v705 = vrot.slane %v680, %v704
        %v706 = vlaneseq
        %v707 = vshrl.u32 %v706, 7
        %v708 = vsub.s32 %v553, %v707
        %v709 = vrot.slane %v683, %v708
        %v710 = vlaneseq
        %v711 = vshrl.u32 %v710, 7
        %v712 = vsub.s32 %v553, %v711
        %v713 = vrot.slane %v686, %v712
        %v714 = vlaneseq
        %v715 = vshrl.u32 %v714, 7
        %v716 = vsub.s32 %v553, %v715
        %v717 = vrot.slane %v689, %v716
        %v718 = vlaneseq
        %v719 = vshrl.u32 %v718, 7
        %v720 = vsub.s32 %v553, %v719
        %v721 = vrot.slane %v692, %v720
        %v722 = vlaneseq
        %v723 = vshrl.u32 %v722, 7
        %v724 = vsub.s32 %v553, %v723
        %v725 = vrot.slane %v695, %v724
        %v726 = vlaneseq
        %v727 = vshrl.u32 %v726, 7
        %v728 = vsub.s32 %v553, %v727
        %v729 = vrot.slane %v698, %v728
        %v730 = vlaneseq
        %v731 = vshrl.u32 %v730, 7
        %v732 = vsub.s32 %v553, %v731
        %v733 = vrot.slane %v701, %v732
        %v734 = vsel %vm586, %v709, %v705
        %v735 = vsel %vm588, %v713, %v734
        %v736 = vsel %vm590, %v717, %v735
        %v737 = vsel %vm592, %v721, %v736
        %v738 = vsel %vm594, %v725, %v737
        %v739 = vsel %vm596, %v729, %v738
        %v740 = vsel %vm598, %v733, %v739
        %v742 = vsel %vm601, %v740, 0.0
        %743 = vadd.xlane.f32.xlu0 %v742
        %v744 = vpop.xlane.xlu0 %743
        %v746 = vlaneseq
        %v747 = vshrl.u32 %v746, 7
        %v748 = vsub.s32 0, %v747
        %v749 = vrot.slane %v744, %v748
        %v750 = vlaneseq
        %v751 = vshrl.u32 %v750, 7
        %v752 = vsub.s32 1, %v751
        %v753 = vrot.slane %v744, %v752
        %v754 = vlaneseq
        %v755 = vshrl.u32 %v754, 7
        %v756 = vsub.s32 2, %v755
        %v757 = vrot.slane %v744, %v756
        %v758 = vlaneseq
        %v759 = vshrl.u32 %v758, 7
        %v760 = vsub.s32 3, %v759
        %v761 = vrot.slane %v744, %v760
        %v762 = vlaneseq
        %v763 = vshrl.u32 %v762, 7
        %v764 = vsub.s32 4, %v763
        %v765 = vrot.slane %v744, %v764
        %v766 = vlaneseq
        %v767 = vshrl.u32 %v766, 7
        %v768 = vsub.s32 5, %v767
        %v769 = vrot.slane %v744, %v768
        %v770 = vlaneseq
        %v771 = vshrl.u32 %v770, 7
        %v772 = vsub.s32 6, %v771
        %v773 = vrot.slane %v744, %v772
        %v774 = vlaneseq
        %v775 = vshrl.u32 %v774, 7
        %v776 = vsub.s32 7, %v775
        %v777 = vrot.slane %v744, %v776
        %v786 = vrcp.pop %v749
        %v787 = vmul.f32 %v655, %v786
        %v788 = vrcp.pop %v753
        %v789 = vmul.f32 %v657, %v788
        %v790 = vrcp.pop %v757
        %v791 = vmul.f32 %v659, %v790
        %v792 = vrcp.pop %v761
        %v793 = vmul.f32 %v661, %v792
        %v794 = vrcp.pop %v765
        %v795 = vmul.f32 %v663, %v794
        %v796 = vrcp.pop %v769
        %v797 = vmul.f32 %v665, %v796
        %v798 = vrcp.pop %v773
        %v799 = vmul.f32 %v667, %v798
        %v800 = vrcp.pop %v777
        %v801 = vmul.f32 %v669, %v800
        %803 = vset.pattern.permute.xlu0 0
        %804 = vperm.xlu0 %803, %v787
        %v805 = vpop.permute.xlu0 %804
        %808 = vset.pattern.permute.xlu0 0
        %809 = vperm.xlu0 %808, %v789
        %v810 = vpop.permute.xlu0 %809
        %813 = vset.pattern.permute.xlu0 0
        %814 = vperm.xlu0 %813, %v791
        %v815 = vpop.permute.xlu0 %814
        %818 = vset.pattern.permute.xlu0 0
        %819 = vperm.xlu0 %818, %v793
        %v820 = vpop.permute.xlu0 %819
        %823 = vset.pattern.permute.xlu0 0
        %824 = vperm.xlu0 %823, %v795
        %v825 = vpop.permute.xlu0 %824
        %828 = vset.pattern.permute.xlu0 0
        %829 = vperm.xlu0 %828, %v797
        %v830 = vpop.permute.xlu0 %829
        %833 = vset.pattern.permute.xlu0 0
        %834 = vperm.xlu0 %833, %v799
        %v835 = vpop.permute.xlu0 %834
        %838 = vset.pattern.permute.xlu0 0
        %839 = vperm.xlu0 %838, %v801
        %v840 = vpop.permute.xlu0 %839
        %v842 = vmul.f32 %v271, %v805
        %v843 = vmul.f32 %v272, %v805
        %v844 = vmul.f32 %v273, %v810
        %v845 = vmul.f32 %v274, %v810
        %v846 = vmul.f32 %v275, %v815
        %v847 = vmul.f32 %v276, %v815
        %v848 = vmul.f32 %v277, %v820
        %v849 = vmul.f32 %v278, %v820
        %v850 = vmul.f32 %v279, %v825
        %v851 = vmul.f32 %v280, %v825
        %v852 = vmul.f32 %v281, %v830
        %v853 = vmul.f32 %v282, %v830
        %v854 = vmul.f32 %v283, %v835
        %v855 = vmul.f32 %v284, %v835
        %v856 = vmul.f32 %v285, %v840
        %v857 = vmul.f32 %v286, %v840
        %v858 = vrot.slane %v842, 4
        %v859 = vadd.f32 %v842, %v858
        %v860 = vrot.slane %v859, 2
        %v861 = vadd.f32 %v859, %v860
        %v862 = vrot.slane %v861, 1
        %v863 = vadd.f32 %v861, %v862
        %v864 = vrot.slane %v843, 4
        %v865 = vadd.f32 %v843, %v864
        %v866 = vrot.slane %v865, 2
        %v867 = vadd.f32 %v865, %v866
        %v868 = vrot.slane %v867, 1
        %v869 = vadd.f32 %v867, %v868
        %v870 = vrot.slane %v844, 4
        %v871 = vadd.f32 %v844, %v870
        %v872 = vrot.slane %v871, 2
        %v873 = vadd.f32 %v871, %v872
        %v874 = vrot.slane %v873, 1
        %v875 = vadd.f32 %v873, %v874
        %v876 = vrot.slane %v845, 4
        %v877 = vadd.f32 %v845, %v876
        %v878 = vrot.slane %v877, 2
        %v879 = vadd.f32 %v877, %v878
        %v880 = vrot.slane %v879, 1
        %v881 = vadd.f32 %v879, %v880
        %v882 = vrot.slane %v846, 4
        %v883 = vadd.f32 %v846, %v882
        %v884 = vrot.slane %v883, 2
        %v885 = vadd.f32 %v883, %v884
        %v886 = vrot.slane %v885, 1
        %v887 = vadd.f32 %v885, %v886
        %v888 = vrot.slane %v847, 4
        %v889 = vadd.f32 %v847, %v888
        %v890 = vrot.slane %v889, 2
        %v891 = vadd.f32 %v889, %v890
        %v892 = vrot.slane %v891, 1
        %v893 = vadd.f32 %v891, %v892
        %v894 = vrot.slane %v848, 4
        %v895 = vadd.f32 %v848, %v894
        %v896 = vrot.slane %v895, 2
        %v897 = vadd.f32 %v895, %v896
        %v898 = vrot.slane %v897, 1
        %v899 = vadd.f32 %v897, %v898
        %v900 = vrot.slane %v849, 4
        %v901 = vadd.f32 %v849, %v900
        %v902 = vrot.slane %v901, 2
        %v903 = vadd.f32 %v901, %v902
        %v904 = vrot.slane %v903, 1
        %v905 = vadd.f32 %v903, %v904
        %v906 = vrot.slane %v850, 4
        %v907 = vadd.f32 %v850, %v906
        %v908 = vrot.slane %v907, 2
        %v909 = vadd.f32 %v907, %v908
        %v910 = vrot.slane %v909, 1
        %v911 = vadd.f32 %v909, %v910
        %v912 = vrot.slane %v851, 4
        %v913 = vadd.f32 %v851, %v912
        %v914 = vrot.slane %v913, 2
        %v915 = vadd.f32 %v913, %v914
        %v916 = vrot.slane %v915, 1
        %v917 = vadd.f32 %v915, %v916
        %v918 = vrot.slane %v852, 4
        %v919 = vadd.f32 %v852, %v918
        %v920 = vrot.slane %v919, 2
        %v921 = vadd.f32 %v919, %v920
        %v922 = vrot.slane %v921, 1
        %v923 = vadd.f32 %v921, %v922
        %v924 = vrot.slane %v853, 4
        %v925 = vadd.f32 %v853, %v924
        %v926 = vrot.slane %v925, 2
        %v927 = vadd.f32 %v925, %v926
        %v928 = vrot.slane %v927, 1
        %v929 = vadd.f32 %v927, %v928
        %v930 = vrot.slane %v854, 4
        %v931 = vadd.f32 %v854, %v930
        %v932 = vrot.slane %v931, 2
        %v933 = vadd.f32 %v931, %v932
        %v934 = vrot.slane %v933, 1
        %v935 = vadd.f32 %v933, %v934
        %v936 = vrot.slane %v855, 4
        %v937 = vadd.f32 %v855, %v936
        %v938 = vrot.slane %v937, 2
        %v939 = vadd.f32 %v937, %v938
        %v940 = vrot.slane %v939, 1
        %v941 = vadd.f32 %v939, %v940
        %v942 = vrot.slane %v856, 4
        %v943 = vadd.f32 %v856, %v942
        %v944 = vrot.slane %v943, 2
        %v945 = vadd.f32 %v943, %v944
        %v946 = vrot.slane %v945, 1
        %v947 = vadd.f32 %v945, %v946
        %v948 = vrot.slane %v857, 4
        %v949 = vadd.f32 %v857, %v948
        %v950 = vrot.slane %v949, 2
        %v951 = vadd.f32 %v949, %v950
        %v952 = vrot.slane %v951, 1
        %v953 = vadd.f32 %v951, %v952
        %v970 = vsel %vm586, %v875, %v863
        %v971 = vsel %vm588, %v887, %v970
        %v972 = vsel %vm590, %v899, %v971
        %v973 = vsel %vm592, %v911, %v972
        %v974 = vsel %vm594, %v923, %v973
        %v975 = vsel %vm596, %v935, %v974
        %v976 = vsel %vm598, %v947, %v975
        %v977 = vsel %vm586, %v881, %v869
        %v978 = vsel %vm588, %v893, %v977
        %v979 = vsel %vm590, %v905, %v978
        %v980 = vsel %vm592, %v917, %v979
        %v981 = vsel %vm594, %v929, %v980
        %v982 = vsel %vm596, %v941, %v981
        %v983 = vsel %vm598, %v953, %v982
        %986 = vst [vmem:[%s259] sm:$0xff] %v976
        %987 = vst [vmem:[%s259 + $0x8] sm:$0xff] %v983
        %v988 = vlaneseq
        %v989 = vshrl.u32 %v988, 7
        %v990 = vsub.s32 %v553, %v989
        %v991 = vrot.slane %v805, %v990
        %v992 = vlaneseq
        %v993 = vshrl.u32 %v992, 7
        %v994 = vsub.s32 %v553, %v993
        %v995 = vrot.slane %v810, %v994
        %v996 = vlaneseq
        %v997 = vshrl.u32 %v996, 7
        %v998 = vsub.s32 %v553, %v997
        %v999 = vrot.slane %v815, %v998
        %v1000 = vlaneseq
        %v1001 = vshrl.u32 %v1000, 7
        %v1002 = vsub.s32 %v553, %v1001
        %v1003 = vrot.slane %v820, %v1002
        %v1004 = vlaneseq
        %v1005 = vshrl.u32 %v1004, 7
        %v1006 = vsub.s32 %v553, %v1005
        %v1007 = vrot.slane %v825, %v1006
        %v1008 = vlaneseq
        %v1009 = vshrl.u32 %v1008, 7
        %v1010 = vsub.s32 %v553, %v1009
        %v1011 = vrot.slane %v830, %v1010
        %v1012 = vlaneseq
        %v1013 = vshrl.u32 %v1012, 7
        %v1014 = vsub.s32 %v553, %v1013
        %v1015 = vrot.slane %v835, %v1014
        %v1016 = vlaneseq
        %v1017 = vshrl.u32 %v1016, 7
        %v1018 = vsub.s32 %v553, %v1017
        %v1019 = vrot.slane %v840, %v1018
        %v1020 = vsel %vm586, %v995, %v991
        %v1021 = vsel %vm588, %v999, %v1020
        %v1022 = vsel %vm590, %v1003, %v1021
        %v1023 = vsel %vm592, %v1007, %v1022
        %v1024 = vsel %vm594, %v1011, %v1023
        %v1025 = vsel %vm596, %v1015, %v1024
        %v1026 = vsel %vm598, %v1019, %v1025
        %1028 = vst.msk [vmem:[%s270] sm:$0xff] %vm601, %v1026
        %s1029 = sand.u32 %s121, 1
        %s1030 = scalar_lea.sflag [#allocation4], %s1029
        %s1031 = sand.u32 %s121, 1
        %s1032 = smul.addr %s1031, 16
        %s1033 = scalar_lea.vmem [#allocation7], %s1032
        %p1034 = scmp.lt.s32.totalorder %s24, 1
        %s1035 = scalar_select %p1034, %s24, 1
        %s1036 = smul.addr %s1035, 8
        %s1037 = scalar_lea.vmem %s5, %s1036
        // Predicated region
        $region45: #{tpu_custom_call.1} parent=35 // pred_check
          %p1038 = pneg %p131
        $region46: #{tpu_custom_call.1} parent=35 // pred_check_branch
          %1040 = sbr.rel (%p1038) target = $region48
        $region47: #{tpu_custom_call.1} parent=35 // pred_region
          %s1042 = ssub.s32 256, 256
          %1043 = vsyncadd %s1030, %s1042
          %s1044 = smul.addr %s24, 2
          %s1045 = smul.addr %s1044, 128
          %s1046 = scalar_lea.hbm %s4, %s1045
          %s1048 = sshll.u32 %s1033, 4
          %s1049 = int_to_ptr.vmem [resolvable:$true] %s1048
          %1051 = dma.vmem_to_hbm [thread:$0]  %s1049, 256, %s1046, %s1030
        $region48: #{tpu_custom_call.1} parent=35 // pred_fallthru
          _
        // Predicated region
        $region49: #{tpu_custom_call.1} parent=35 // pred_check
          %p1052 = pneg %p157
        $region50: #{tpu_custom_call.1} parent=35 // pred_check_branch
          %1054 = sbr.rel (%p1052) target = $region52
        $region51: #{tpu_custom_call.1} parent=35 // pred_region
          _
        $region52: #{tpu_custom_call.1} parent=35 // pred_fallthru
          _
      $region36: #{tpu_custom_call.1} parent=5 // pred_fallthru
        _
      %p1055 = scmp.le.s32.totalorder 2, %s19
      // Predicated region
      $region53: #{tpu_custom_call.1} parent=5 // pred_check
        %p1056 = pneg %p1055
      $region54: #{tpu_custom_call.1} parent=5 // pred_check_branch
        %1058 = sbr.rel (%p1056) target = $region56
      $region55: #{tpu_custom_call.1} parent=5 // pred_region
        %s1059 = ssub.s32 %s19, 2
        // Predicated region
        $region57: #{tpu_custom_call.1} parent=55 // pred_check
          %p1060 = pneg %p137
        $region58: #{tpu_custom_call.1} parent=55 // pred_check_branch
          %1062 = sbr.rel (%p1060) target = $region60
        $region59: #{tpu_custom_call.1} parent=55 // pred_region
          %s1063 = sand.u32 %s122, 1
          %s1064 = scalar_lea.sflag [#allocation4], %s1063
          %s1065 = sand.u32 %s122, 1
          %s1066 = smul.addr %s1065, 16
          %s1067 = scalar_lea.vmem [#allocation7], %s1066
          %1068 = dma.done %s1064, 256
        $region60: #{tpu_custom_call.1} parent=55 // pred_fallthru
          _
        // Predicated region
        $region61: #{tpu_custom_call.1} parent=55 // pred_check
          %p1069 = pneg %p163
        $region62: #{tpu_custom_call.1} parent=55 // pred_check_branch
          %1071 = sbr.rel (%p1069) target = $region64
        $region63: #{tpu_custom_call.1} parent=55 // pred_region
          %p1072 = scmp.lt.s32.totalorder %s25, 1
          %s1073 = scalar_select %p1072, %s25, 1
          %s1074 = smul.addr %s1073, 8
          %s1075 = scalar_lea.vmem %s5, %s1074
        $region64: #{tpu_custom_call.1} parent=55 // pred_fallthru
          _
      $region56: #{tpu_custom_call.1} parent=5 // pred_fallthru
        _
    $region6: #{tpu_custom_call.1} parent=1 // loop_footer
      %s23 = sadd.s32 1, %s19
    $region7: #{tpu_custom_call.1} parent=1 // loop_footer_branch
      %18 = sbr.rel target = $region3
    $region8: #{tpu_custom_call.1} parent=1 // loop_exit
      _
    %1076 = vsyncpa [#allocation3], 1
    %s1077 = scalar_lea.sflag [#allocation3], 1
    %1078 = vsyncpa %s1077, 1
    %1079 = vsyncpa [#allocation6], 1
    %1080 = vsyncpa [#allocation4], 1
    %s1081 = scalar_lea.sflag [#allocation4], 1
    %1082 = vsyncpa %s1081, 1

</llo_original>
